<compile_context>
chip_gen: v7x
topology: tpu7x:2x2x1
jax: 0.10.0
libtpu: 0.0.40
codegen_flags: <defaults>
</compile_context>

<pallas_src>
import math

import jax
import jax.numpy as jnp
from jax.experimental import pallas as pl
from jax.experimental.pallas import tpu as pltpu

_LANE = 128


def _base_embedding_kernel(scale_ref, bias_ref, x_ref, o_ref):
    # x_ref: (tile_r, tile_d); scale_ref/bias_ref: (1, tile_d), broadcast over rows.
    o_ref[...] = (scale_ref[...] * x_ref[...] + bias_ref[...]).astype(o_ref.dtype)


def _cdiv(a, b):
    return (a + b - 1) // b


def _round_up(x, m):
    return _cdiv(x, m) * m


def _chip_kind():
    try:
        return jax.devices()[0].device_kind.lower()
    except Exception:
        return ""


def base_embedding(embeddings, scale, bias, *, target_tile_bytes=None):
    """Pallas implementation of BaseEmbedding.forward: scale * embeddings + bias."""
    orig_shape = embeddings.shape
    D = orig_shape[-1]

    kind = _chip_kind()
    is_v7 = "v7" in kind
    is_v5e = ("v5" in kind) and (("lite" in kind) or ("v5e" in kind))

    # Chip-dependent knobs: v7x has 64 MiB VMEM per TC (keep 4 MiB tiles, <=48 MiB
    # scoped limit); v5e/v6e have 128 MiB (bigger tiles, higher cap).
    if target_tile_bytes is None:
        target_tile_bytes = (4 << 20) if is_v7 else (8 << 20)
    vmem_cap = (48 << 20) if is_v7 else (96 << 20)

    # Flatten leading axes -> one long row stream.  Free: contiguous reshape.
    x = embeddings.reshape(-1, D)
    R = x.shape[0]
    itemsize = jnp.dtype(x.dtype).itemsize
    row_align = max(8, 32 // itemsize)  # 8 for f32, 16 for bf16, 32 for int8/fp8

    # Parameters: keep bf16 compute on chips with bf16 VALUs, f32 otherwise.
    if embeddings.dtype == jnp.bfloat16 and not is_v5e:
        param_dtype = jnp.bfloat16
    else:
        param_dtype = jnp.promote_types(embeddings.dtype,
                                        jnp.promote_types(scale.dtype, bias.dtype))

    # Lane-dense repack when D is not a multiple of 128: fold rows into lanes so
    # output stores are unmasked full-lane vst (biggest single lever for streaming).
    Rw, Dw, xw = R, D, x
    scale_flat, bias_flat = scale.reshape(-1), bias.reshape(-1)
    if D % _LANE != 0:
        L = (D * _LANE) // math.gcd(D, _LANE)  # lcm(D, 128)
        if (R * D) % L == 0 and L <= 32768:
            rep = L // D
            Rw = (R * D) // L
            Dw = L
            xw = x.reshape(Rw, Dw)
            scale_flat = jnp.tile(scale_flat, (rep,))
            bias_flat = jnp.tile(bias_flat, (rep,))
        # else: fall back to full-D blocks (correct; masked partial-lane stores).
    scale2d = scale_flat.reshape(1, Dw).astype(param_dtype)
    bias2d = bias_flat.reshape(1, Dw).astype(param_dtype)

    # Column tiling only when a single minimal-height full-width tile would bust
    # the per-buffer budget (wide-D guard, matters on v7x's 64 MiB VMEM).
    if Dw % _LANE == 0 and Dw * row_align * itemsize > target_tile_bytes:
        tile_d = max(_LANE,
                     (target_tile_bytes // (row_align * itemsize)) // _LANE * _LANE)
        tile_d = min(tile_d, Dw)
    else:
        tile_d = Dw  # full width (required when Dw is not a 128-multiple)

    # Row tile sized for ~target_tile_bytes per buffer, sublane-aligned, and NOT
    # padded: the grid uses cdiv and Pallas masks the partial last block.
    tile_r = max(row_align,
                 (target_tile_bytes // (tile_d * itemsize)) // row_align * row_align)
    tile_r = min(tile_r, _round_up(Rw, row_align))
    if is_v7 and Rw > row_align and _cdiv(Rw, tile_r) < 2:
        # Give both v7x TensorCores balanced work on the core-parallel row axis.
        tile_r = max(row_align, _round_up(_cdiv(Rw, 2), row_align))

    grid = (_cdiv(Rw, tile_r), _cdiv(Dw, tile_d))

    # Scoped VMEM: double-buffered input + output tiles + resident scale/bias + slack.
    param_bytes = 2 * tile_d * jnp.dtype(param_dtype).itemsize
    vmem_limit = int(4 * tile_r * tile_d * itemsize + 2 * param_bytes + (4 << 20))
    vmem_limit = max(16 << 20, min(vmem_limit, vmem_cap))

    # dimension_semantics: explicit 2-TC split on v7x; plain parallel elsewhere.
    par = getattr(pltpu, "PARALLEL", "parallel")
    arb = getattr(pltpu, "ARBITRARY", "arbitrary")
    core_par = getattr(pltpu, "CORE_PARALLEL", par)
    dim_sem = (core_par if is_v7 else par, arb)

    out = pl.pallas_call(
        _base_embedding_kernel,
        out_shape=jax.ShapeDtypeStruct((Rw, Dw), embeddings.dtype),
        grid_spec=pltpu.PrefetchScalarGridSpec(
            num_scalar_prefetch=0,
            grid=grid,
            in_specs=[
                pl.BlockSpec((1, tile_d), lambda r, c: (0, c)),        # scale (resident)
                pl.BlockSpec((1, tile_d), lambda r, c: (0, c)),        # bias  (resident)
                pl.BlockSpec((tile_r, tile_d), lambda r, c: (r, c)),   # embeddings tile
            ],
            out_specs=pl.BlockSpec((tile_r, tile_d), lambda r, c: (r, c)),
        ),
        compiler_params=pltpu.CompilerParams(
            dimension_semantics=dim_sem,
            vmem_limit_bytes=vmem_limit,
        ),
    )(scale2d, bias2d, xw)

    return out.reshape(orig_shape)


if __name__ == "__main__":
    key = jax.random.PRNGKey(0)
    k0, k1, k2, k3 = jax.random.split(key, 4)

    # 1) Module-init case: [batch, seq, dim], scale=ones, bias=zeros (f32, D=128).
    B, S, D = 2, 8, 128
    emb = jax.random.normal(k0, (B, S, D), dtype=jnp.float32)
    scale = jnp.ones((D,), dtype=jnp.float32)
    bias = jnp.zeros((D,), dtype=jnp.float32)
    out = base_embedding(emb, scale, bias)
    jax.block_until_ready(out)
    ref = scale * emb + bias
    assert out.shape == emb.shape
    assert jnp.allclose(out, ref, atol=1e-6), "mismatch (base case)"

    # 2) Non-trivial scale/bias, row count not a multiple of the sublane alignment
    #    (exercises the cdiv partial-row-block path, no padding copies).
    B2, S2, D2 = 3, 5, 256
    emb2 = jax.random.normal(k1, (B2, S2, D2), dtype=jnp.float32)
    scale2 = jnp.linspace(0.5, 1.5, D2, dtype=jnp.float32)
    bias2 = jnp.linspace(-1.0, 1.0, D2, dtype=jnp.float32)
    out2 = base_embedding(emb2, scale2, bias2)
    jax.block_until_ready(out2)
    ref2 = scale2 * emb2 + bias2
    assert jnp.allclose(out2, ref2, atol=1e-6), "mismatch (partial row block)"

    # 3) D not a multiple of 128 -> lane-dense fold path (D=64 folds 2 rows/lane-row).
    B3, S3, D3 = 2, 8, 64
    emb3 = jax.random.normal(k2, (B3, S3, D3), dtype=jnp.float32)
    scale3 = jnp.linspace(0.25, 2.0, D3, dtype=jnp.float32)
    bias3 = jnp.linspace(1.0, -1.0, D3, dtype=jnp.float32)
    out3 = base_embedding(emb3, scale3, bias3)
    jax.block_until_ready(out3)
    ref3 = scale3 * emb3 + bias3
    assert jnp.allclose(out3, ref3, atol=1e-6), "mismatch (lane-fold path)"

    # 4) bf16 embeddings (bf16 compute on v6e/v7x, f32 on v5e) - loose tolerance.
    emb4 = jax.random.normal(k3, (2, 8, 128), dtype=jnp.bfloat16)
    scale4 = jnp.linspace(0.5, 1.5, 128, dtype=jnp.float32)
    bias4 = jnp.linspace(-0.5, 0.5, 128, dtype=jnp.float32)
    out4 = base_embedding(emb4, scale4, bias4)
    jax.block_until_ready(out4)
    ref4 = scale4 * emb4.astype(jnp.float32) + bias4
    assert out4.dtype == jnp.bfloat16
    assert jnp.allclose(out4.astype(jnp.float32), ref4, atol=5e-2, rtol=5e-2), \
        "mismatch (bf16 path)"

    print("KERNEL_OK")
</pallas_src>

<mosaic_0001>
module attributes {stable_mosaic.version = 11 : i64} {
  func.func @_base_embedding_kernel(%arg0: i32, %arg1: i32, %arg2: memref<1x128xf32, #tpu.memory_space<vmem>>, %arg3: memref<1x128xf32, #tpu.memory_space<vmem>>, %arg4: memref<16x128xf32, #tpu.memory_space<vmem>>, %arg5: memref<16x128xf32, #tpu.memory_space<vmem>>) attributes {dimension_semantics = [#tpu.dimension_semantics<parallel>, #tpu.dimension_semantics<arbitrary>], iteration_bounds = array<i64: 1, 1>, scalar_prefetch = 0 : i64, scratch_operands = 0 : i64, tpu.core_type = #tpu.core_type<tc>, window_params = [{transform_indices = @transform_0, window_bounds = array<i64: 1, 128>}, {transform_indices = @transform_1, window_bounds = array<i64: 1, 128>}, {transform_indices = @transform_2, window_bounds = array<i64: 16, 128>}, {transform_indices = @transform_3, window_bounds = array<i64: 16, 128>}]} {
    %c0 = arith.constant 0 : index
    %c0_0 = arith.constant 0 : index
    %0 = vector.load %arg2[%c0, %c0_0] : memref<1x128xf32, #tpu.memory_space<vmem>>, vector<1x128xf32>
    %c0_1 = arith.constant 0 : index
    %c0_2 = arith.constant 0 : index
    %1 = vector.load %arg4[%c0_1, %c0_2] : memref<16x128xf32, #tpu.memory_space<vmem>>, vector<16x128xf32>
    %2 = vector.broadcast %0 : vector<1x128xf32> to vector<16x128xf32>
    %3 = arith.mulf %2, %1 : vector<16x128xf32>
    %c0_3 = arith.constant 0 : index
    %c0_4 = arith.constant 0 : index
    %4 = vector.load %arg3[%c0_3, %c0_4] : memref<1x128xf32, #tpu.memory_space<vmem>>, vector<1x128xf32>
    %5 = vector.broadcast %4 : vector<1x128xf32> to vector<16x128xf32>
    %6 = arith.addf %3, %5 : vector<16x128xf32>
    %c0_5 = arith.constant 0 : index
    %c0_6 = arith.constant 0 : index
    %7 = vector.load %arg5[%c0_5, %c0_6] : memref<16x128xf32, #tpu.memory_space<vmem>>, vector<16x128xf32>
    tpu.vector_store %arg5[%c0_5, %c0_6], %6 {strides = array<i32>} : memref<16x128xf32, #tpu.memory_space<vmem>>, vector<16x128xf32>,
    return
  }
  func.func @transform_0(%arg0: i32, %arg1: i32) -> (i32, i32) {
    %c0_i32 = arith.constant 0 : i32
    %c0_i32_0 = arith.constant 0 : i32
    return %c0_i32, %arg1 : i32, i32
  }
  func.func @transform_1(%arg0: i32, %arg1: i32) -> (i32, i32) {
    %c0_i32 = arith.constant 0 : i32
    %c0_i32_0 = arith.constant 0 : i32
    return %c0_i32, %arg1 : i32, i32
  }
  func.func @transform_2(%arg0: i32, %arg1: i32) -> (i32, i32) {
    %c0_i32 = arith.constant 0 : i32
    return %arg0, %arg1 : i32, i32
  }
  func.func @transform_3(%arg0: i32, %arg1: i32) -> (i32, i32) {
    %c0_i32 = arith.constant 0 : i32
    return %arg0, %arg1 : i32, i32
  }
}

</mosaic_0001>

<llo_original>
// kernel: tpu_custom_call.1
$region0: #{tpu_custom_call.1}
  #allocation0 [shape = 'u32[]', space=smem, size = 0x4, offset = 0x4, fixed_abs, tag = 'smem constant byte address 0x4 - core index']
  #allocation1 [shape = 'u32[144,128]{1,0:T(1,128)}', space=vmem, size = 0x12000, scoped, tag = 'internal scratch']
  %s0 = inlined_call_operand.hbm [shape: f32[1,128], index: 0, kind: input, shape index: {}]
  %s1 = inlined_call_operand.vmem [shape: f32[1,128], index: 1, kind: input, shape index: {}]
  %s2 = inlined_call_operand.hbm [shape: f32[16,128], index: 2, kind: input, shape index: {}]
  %s3 = inlined_call_operand.hbm [shape: f32[16,128], index: 3, kind: output, shape index: {}]
  %s4 = sld [smem:[#allocation0]]
  $region30: #{tpu_custom_call.1} parent=0
    _
  %s6 = ssub.s32 1, %s4
  %s7 = scalar_select 0, %s6, %s4
  $region1: #{tpu_custom_call.1} parent=0
    #allocation2 [shape = 'u8[512]{0}', space=vmem, size = 0x400, scoped, tag = 'input window, operand 0, single buffered']
    #allocation3 [shape = 's32[1]{0}', space=sflag, size = 0x4, scoped, tag = 'scoped memory for tpu_custom_call.1']
    #allocation4 [shape = 's32[1]{0}', space=sflag, size = 0x4, scoped, tag = 'scoped memory for tpu_custom_call.1']
    #allocation5 [shape = 'u8[8192]{0}', space=vmem, size = 0x2000, scoped, tag = 'input window, operand 2, single buffered']
    #allocation6 [shape = 's32[1]{0}', space=sflag, size = 0x4, scoped, tag = 'scoped memory for tpu_custom_call.1']
    #allocation7 [shape = 'u8[8192]{0}', space=vmem, size = 0x2000, scoped, tag = 'output window, operand 0, single buffered']
    %8 = vsyncpa [#allocation3], 0
    %9 = vsyncpa [#allocation6], 0
    %10 = vsyncpa [#allocation4], 0
    // Predicated region
    $region2: #{tpu_custom_call.1} parent=1 // pred_check
      _
    $region3: #{tpu_custom_call.1} parent=1 // pred_check_branch
      %12 = sbr.rel (0) target = $region5
    $region4: #{tpu_custom_call.1} parent=1 // pred_region
      %s14 = ssub.s32 16, 16
      %15 = vsyncadd [#allocation3], %s14
      %s17 = sshll.u32 [#allocation2], 4
      %s18 = int_to_ptr.vmem [resolvable:$true] %s17
      %20 = dma.hbm_to_vmem [thread:$0]  %s0, 16, %s18, [#allocation3]
    $region5: #{tpu_custom_call.1} parent=1 // pred_fallthru
      _
    // Predicated region
    $region6: #{tpu_custom_call.1} parent=1 // pred_check
      _
    $region7: #{tpu_custom_call.1} parent=1 // pred_check_branch
      %22 = sbr.rel (0) target = $region9
    $region8: #{tpu_custom_call.1} parent=1 // pred_region
      _
    $region9: #{tpu_custom_call.1} parent=1 // pred_fallthru
      _
    // Predicated region
    $region10: #{tpu_custom_call.1} parent=1 // pred_check
      _
    $region11: #{tpu_custom_call.1} parent=1 // pred_check_branch
      %24 = sbr.rel (0) target = $region13
    $region12: #{tpu_custom_call.1} parent=1 // pred_region
      %s26 = ssub.s32 256, 256
      %27 = vsyncadd [#allocation6], %s26
      %s28 = sshll.u32 [#allocation5], 4
      %s29 = int_to_ptr.vmem [resolvable:$true] %s28
      %34 = dma.hbm_to_vmem [thread:$0]  %s2, 256, %s29, [#allocation6], 128, 128, 8
    $region13: #{tpu_custom_call.1} parent=1 // pred_fallthru
      _
    // Predicated region
    $region14: #{tpu_custom_call.1} parent=1 // pred_check
      _
    $region15: #{tpu_custom_call.1} parent=1 // pred_check_branch
      %36 = sbr.rel (0) target = $region17
    $region16: #{tpu_custom_call.1} parent=1 // pred_region
      %37 = dma.done [#allocation3], 16
    $region17: #{tpu_custom_call.1} parent=1 // pred_fallthru
      _
    // Predicated region
    $region18: #{tpu_custom_call.1} parent=1 // pred_check
      _
    $region19: #{tpu_custom_call.1} parent=1 // pred_check_branch
      %39 = sbr.rel (0) target = $region21
    $region20: #{tpu_custom_call.1} parent=1 // pred_region
      %40 = dma.done [#allocation6], 256
    $region21: #{tpu_custom_call.1} parent=1 // pred_fallthru
      _
    %v41 = vld [vmem:[#allocation2] sm:$0x1]
    %v42 = vld [vmem:[#allocation5] sm:$0xff]
    %v43 = vld [vmem:[#allocation5 + $0x8] sm:$0xff]
    %v45 = vlaneseq
    %v46 = vshrl.u32 %v45, 7
    %v47 = vsub.s32 0, %v46
    %v48 = vrot.slane %v41, %v47
    %v50 = vmul.f32 %v48, %v42
    %v51 = vmul.f32 %v48, %v43
    %v52 = vld [vmem:[%s1] sm:$0x1]
    %v54 = vlaneseq
    %v55 = vshrl.u32 %v54, 7
    %v56 = vsub.s32 0, %v55
    %v57 = vrot.slane %v52, %v56
    %v59 = vadd.f32 %v50, %v57
    %v60 = vadd.f32 %v51, %v57
    %61 = vst [vmem:[#allocation7] sm:$0xff] %v59
    %62 = vst [vmem:[#allocation7 + $0x8] sm:$0xff] %v60
    // Predicated region
    $region22: #{tpu_custom_call.1} parent=1 // pred_check
      _
    $region23: #{tpu_custom_call.1} parent=1 // pred_check_branch
      %64 = sbr.rel (0) target = $region25
    $region24: #{tpu_custom_call.1} parent=1 // pred_region
      %s66 = ssub.s32 256, 256
      %67 = vsyncadd [#allocation4], %s66
      %s68 = sshll.u32 [#allocation7], 4
      %s69 = int_to_ptr.vmem [resolvable:$true] %s68
      %74 = dma.vmem_to_hbm [thread:$0]  %s69, 256, %s3, [#allocation4], 128, 128, 8
    $region25: #{tpu_custom_call.1} parent=1 // pred_fallthru
      _
    // Predicated region
    $region26: #{tpu_custom_call.1} parent=1 // pred_check
      _
    $region27: #{tpu_custom_call.1} parent=1 // pred_check_branch
      %76 = sbr.rel (0) target = $region29
    $region28: #{tpu_custom_call.1} parent=1 // pred_region
      %77 = dma.done [#allocation4], 256
    $region29: #{tpu_custom_call.1} parent=1 // pred_fallthru
      _
    %78 = vsyncpa [#allocation3], 1
    %79 = vsyncpa [#allocation6], 1
    %80 = vsyncpa [#allocation4], 1

</llo_original>
